<compile_context>
chip_gen: v5e
topology: v5e:2x2
jax: 0.10.0
libtpu: 0.0.40
codegen_flags: <defaults>
</compile_context>

<pallas_src>
import functools

import jax
import jax.numpy as jnp
from jax.experimental import pallas as pl

BN_EPS = 1e-5


# ----------------------------- Pallas kernel ------------------------------- #

def _generator_fused_kernel(num_hidden, z_ref, l_ref, w0z_ref, w0l_ref, b0_ref,
                            gamma_ref, beta_ref, *rest):
    """Fused Linear+BN+Sigmoid followed by num_hidden x (Linear+Sigmoid)."""
    o_ref = rest[-1]
    hidden_refs = rest[:-1]                      # pairs (w, b), already bf16/f32

    def sigmoid(v):
        # exp -> EUP, approx reciprocal -> EUP; both off the VPU critical path.
        return pl.reciprocal(1.0 + jnp.exp(-v), approx=True)

    # Layer 0: folded concat -> two matmuls accumulating into the same f32 tile.
    zb = z_ref[...].astype(jnp.bfloat16)
    lb = l_ref[...].astype(jnp.bfloat16)
    h = (jnp.dot(zb, w0z_ref[...], preferred_element_type=jnp.float32)
         + jnp.dot(lb, w0l_ref[...], preferred_element_type=jnp.float32)
         + b0_ref[...])                          # (B, Hp) f32

    # BatchNorm1d, training-mode biased batch stats, single-pass variance.
    mean = jnp.mean(h, axis=0, keepdims=True)                       # (1, Hp)
    var = jnp.maximum(jnp.mean(h * h, axis=0, keepdims=True) - mean * mean, 0.0)
    y = gamma_ref[...] * ((h - mean) * jax.lax.rsqrt(var + BN_EPS)) + beta_ref[...]
    x = sigmoid(y)                                                  # (B, Hp) f32

    # Hidden Linear+Sigmoid layers, activation stays resident in VMEM.
    for i in range(num_hidden):
        w_ref = hidden_refs[2 * i]
        b_ref = hidden_refs[2 * i + 1]
        hh = jnp.dot(x.astype(jnp.bfloat16), w_ref[...],
                     preferred_element_type=jnp.float32) + b_ref[...]
        x = sigmoid(hh)

    o_ref[...] = x


# ------------------------------ host wrappers ------------------------------ #

def _round_up(x, m):
    return (x + m - 1) // m * m


def init_generator_params(key, inner_dim, hidden_dim, hidden_layers=2):
    """Logical (unpadded, fp32) params; shapes match the PyTorch module
    (Linear weights stored pre-transposed as (in, out))."""
    params = {}
    k0, key = jax.random.split(key)
    params["w0"] = (jax.random.normal(k0, (inner_dim, hidden_dim), jnp.float32)
                    * (1.0 / jnp.sqrt(inner_dim)))
    kb, key = jax.random.split(key)
    params["b0"] = jax.random.normal(kb, (1, hidden_dim), jnp.float32) * 0.1
    params["gamma"] = jnp.ones((1, hidden_dim), jnp.float32)
    params["beta"] = jnp.zeros((1, hidden_dim), jnp.float32)
    params["hidden"] = []
    for _ in range(hidden_layers - 1):
        kw, key = jax.random.split(key)
        w = (jax.random.normal(kw, (hidden_dim, hidden_dim), jnp.float32)
             * (1.0 / jnp.sqrt(hidden_dim)))
        kb2, key = jax.random.split(key)
        b = jax.random.normal(kb2, (1, hidden_dim), jnp.float32) * 0.1
        params["hidden"].append((w, b))
    return params


def pack_generator_params(params, z_dim):
    """Bake the lane-dense padding (H -> multiple of 128) and the concat split
    into kernel-ready params. Matmul weights stored bf16, bias/BN params fp32.
    Padding is with zeros (ones for gamma), so padded lanes never leak into the
    real outputs."""
    H = params["w0"].shape[1]
    Hp = _round_up(H, 128)
    pc = Hp - H
    w0 = params["w0"]
    packed = {
        "w0z": jnp.pad(w0[:z_dim], ((0, 0), (0, pc))).astype(jnp.bfloat16),
        "w0l": jnp.pad(w0[z_dim:], ((0, 0), (0, pc))).astype(jnp.bfloat16),
        "b0": jnp.pad(params["b0"], ((0, 0), (0, pc))),
        "gamma": jnp.pad(params["gamma"], ((0, 0), (0, pc)), constant_values=1.0),
        "beta": jnp.pad(params["beta"], ((0, 0), (0, pc))),
    }
    hidden = []
    for w, b in params["hidden"]:
        hidden.append((jnp.pad(w, ((0, Hp - H), (0, pc))).astype(jnp.bfloat16),
                       jnp.pad(b, ((0, 0), (0, pc)))))
    packed["hidden"] = tuple(hidden)
    return packed


@functools.partial(jax.jit, static_argnames=("hidden_dim",))
def generator_forward(packed, z, l, *, hidden_dim):
    B, z_dim = z.shape
    l_dim = l.shape[1]
    Hp = packed["b0"].shape[1]
    hidden = packed["hidden"]
    num_hidden = len(hidden)
    flat_hidden = [t for wb in hidden for t in wb]

    inputs = [z, l, packed["w0z"], packed["w0l"], packed["b0"],
              packed["gamma"], packed["beta"], *flat_hidden]

    flops = (2 * B * (z_dim + l_dim) * Hp          # layer 0 matmuls
             + 2 * B * Hp * Hp * num_hidden        # hidden matmuls
             + 12 * B * Hp)                        # BN + activations (approx)
    transcendentals = B * Hp * (1 + num_hidden)    # one exp per sigmoid element
    bytes_accessed = (sum(int(a.size) * a.dtype.itemsize for a in inputs)
                      + B * Hp * 4)

    out_padded = pl.pallas_call(
        functools.partial(_generator_fused_kernel, num_hidden),
        out_shape=jax.ShapeDtypeStruct((B, Hp), jnp.float32),
        cost_estimate=pl.CostEstimate(flops=flops,
                                      transcendentals=transcendentals,
                                      bytes_accessed=bytes_accessed),
    )(*inputs)
    return out_padded[:, :hidden_dim]


# pure-JAX reference (exact fp32 module semantics) for a sanity check
def generator_forward_ref(params, z, l):
    x = jnp.concatenate([z, l], axis=1)
    h = x @ params["w0"] + params["b0"]
    mean = jnp.mean(h, axis=0, keepdims=True)
    var = jnp.mean((h - mean) ** 2, axis=0, keepdims=True)
    h = params["gamma"] * (h - mean) / jnp.sqrt(var + BN_EPS) + params["beta"]
    x = jax.nn.sigmoid(h)
    for w, b in params["hidden"]:
        x = jax.nn.sigmoid(x @ w + b)
    return x


if __name__ == "__main__":
    # Small, deterministic shapes consistent with the module:
    # z: (B, z_dim), l: (B, l_dim), inner_dim = z_dim + l_dim.
    B, z_dim, l_dim = 8, 10, 6
    inner_dim = z_dim + l_dim          # 16
    hidden_dim = 32
    hidden_layers = 3                  # 1x (Linear+BN+Sigmoid) + 2x (Linear+Sigmoid)
    output_dim = 32                    # unused in forward (as in the PyTorch module)

    key = jax.random.PRNGKey(0)
    kp, kz, kl = jax.random.split(key, 3)
    params = init_generator_params(kp, inner_dim, hidden_dim, hidden_layers)
    packed = pack_generator_params(params, z_dim)
    z = jax.random.normal(kz, (B, z_dim), jnp.float32)
    l = jax.random.normal(kl, (B, l_dim), jnp.float32)

    out = generator_forward(packed, z, l, hidden_dim=hidden_dim)
    out = jax.block_until_ready(out)

    ref = generator_forward_ref(params, z, l)
    assert out.shape == (B, hidden_dim)
    # bf16 MXU inputs + approx-reciprocal sigmoid vs exact fp32 reference:
    # tolerance widened accordingly (outputs are in (0, 1)).
    assert jnp.allclose(out, ref, atol=2e-2, rtol=2e-2), "mismatch vs reference"

    print("KERNEL_OK")
</pallas_src>

<mosaic_0001>
module attributes {stable_mosaic.version = 11 : i64} {
  func.func @_generator_fused_kernel(%arg0: memref<8x10xf32, #tpu.memory_space<vmem>>, %arg1: memref<8x6xf32, #tpu.memory_space<vmem>>, %arg2: memref<10x128xbf16, #tpu.memory_space<vmem>>, %arg3: memref<6x128xbf16, #tpu.memory_space<vmem>>, %arg4: memref<1x128xf32, #tpu.memory_space<vmem>>, %arg5: memref<1x128xf32, #tpu.memory_space<vmem>>, %arg6: memref<1x128xf32, #tpu.memory_space<vmem>>, %arg7: memref<128x128xbf16, #tpu.memory_space<vmem>>, %arg8: memref<1x128xf32, #tpu.memory_space<vmem>>, %arg9: memref<128x128xbf16, #tpu.memory_space<vmem>>, %arg10: memref<1x128xf32, #tpu.memory_space<vmem>>, %arg11: memref<8x128xf32, #tpu.memory_space<vmem>>) attributes {dimension_semantics = [], scalar_prefetch = 0 : i64, scratch_operands = 0 : i64, tpu.core_type = #tpu.core_type<tc>} {
    %c0 = arith.constant 0 : index
    %c0_0 = arith.constant 0 : index
    %0 = vector.load %arg0[%c0, %c0_0] : memref<8x10xf32, #tpu.memory_space<vmem>>, vector<8x10xf32>
    %1 = arith.truncf %0 : vector<8x10xf32> to vector<8x10xbf16>
    %c0_1 = arith.constant 0 : index
    %c0_2 = arith.constant 0 : index
    %2 = vector.load %arg1[%c0_1, %c0_2] : memref<8x6xf32, #tpu.memory_space<vmem>>, vector<8x6xf32>
    %3 = arith.truncf %2 : vector<8x6xf32> to vector<8x6xbf16>
    %c0_3 = arith.constant 0 : index
    %c0_4 = arith.constant 0 : index
    %4 = vector.load %arg2[%c0_3, %c0_4] : memref<10x128xbf16, #tpu.memory_space<vmem>>, vector<10x128xbf16>
    %cst = arith.constant dense<0.000000e+00> : vector<8x128xf32>
    %5 = tpu.matmul %1, %4, %cst {dimension_numbers = #tpu.dot_dimension_numbers<[1], [0], [0], [1], [0, 0, 1, 1], [], []>} : vector<8x10xbf16>, vector<10x128xbf16>, vector<8x128xf32> -> vector<8x128xf32>
    %c0_5 = arith.constant 0 : index
    %c0_6 = arith.constant 0 : index
    %6 = vector.load %arg3[%c0_5, %c0_6] : memref<6x128xbf16, #tpu.memory_space<vmem>>, vector<6x128xbf16>
    %cst_7 = arith.constant dense<0.000000e+00> : vector<8x128xf32>
    %7 = tpu.matmul %3, %6, %cst_7 {dimension_numbers = #tpu.dot_dimension_numbers<[1], [0], [0], [1], [0, 0, 1, 1], [], []>} : vector<8x6xbf16>, vector<6x128xbf16>, vector<8x128xf32> -> vector<8x128xf32>
    %8 = arith.addf %5, %7 : vector<8x128xf32>
    %c0_8 = arith.constant 0 : index
    %c0_9 = arith.constant 0 : index
    %9 = vector.load %arg4[%c0_8, %c0_9] : memref<1x128xf32, #tpu.memory_space<vmem>>, vector<1x128xf32>
    %10 = vector.broadcast %9 : vector<1x128xf32> to vector<8x128xf32>
    %11 = arith.addf %8, %10 : vector<8x128xf32>
    %cst_10 = arith.constant dense<0.000000e+00> : vector<128xf32>
    %12 = vector.multi_reduction <add>, %11, %cst_10 [0] : vector<8x128xf32> to vector<128xf32>
    %13 = vector.shape_cast %12 : vector<128xf32> to vector<1x128xf32>
    %cst_11 = arith.constant 8.000000e+00 : f32
    %14 = vector.broadcast %cst_11 : f32 to vector<1x128xf32>
    %15 = arith.divf %13, %14 : vector<1x128xf32>
    %16 = arith.mulf %11, %11 : vector<8x128xf32>
    %cst_12 = arith.constant dense<0.000000e+00> : vector<128xf32>
    %17 = vector.multi_reduction <add>, %16, %cst_12 [0] : vector<8x128xf32> to vector<128xf32>
    %18 = vector.shape_cast %17 : vector<128xf32> to vector<1x128xf32>
    %cst_13 = arith.constant 8.000000e+00 : f32
    %19 = vector.broadcast %cst_13 : f32 to vector<1x128xf32>
    %20 = arith.divf %18, %19 : vector<1x128xf32>
    %21 = arith.mulf %15, %15 : vector<1x128xf32>
    %22 = arith.subf %20, %21 : vector<1x128xf32>
    %cst_14 = arith.constant 0.000000e+00 : f32
    %23 = vector.broadcast %cst_14 : f32 to vector<1x128xf32>
    %24 = arith.maximumf %22, %23 : vector<1x128xf32>
    %c0_15 = arith.constant 0 : index
    %c0_16 = arith.constant 0 : index
    %25 = vector.load %arg5[%c0_15, %c0_16] : memref<1x128xf32, #tpu.memory_space<vmem>>, vector<1x128xf32>
    %26 = vector.broadcast %15 : vector<1x128xf32> to vector<8x128xf32>
    %27 = arith.subf %11, %26 : vector<8x128xf32>
    %cst_17 = arith.constant 9.99999974E-6 : f32
    %28 = vector.broadcast %cst_17 : f32 to vector<1x128xf32>
    %29 = arith.addf %24, %28 : vector<1x128xf32>
    %30 = math.rsqrt %29 : vector<1x128xf32>
    %31 = vector.broadcast %30 : vector<1x128xf32> to vector<8x128xf32>
    %32 = arith.mulf %27, %31 : vector<8x128xf32>
    %33 = vector.broadcast %25 : vector<1x128xf32> to vector<8x128xf32>
    %34 = arith.mulf %33, %32 : vector<8x128xf32>
    %c0_18 = arith.constant 0 : index
    %c0_19 = arith.constant 0 : index
    %35 = vector.load %arg6[%c0_18, %c0_19] : memref<1x128xf32, #tpu.memory_space<vmem>>, vector<1x128xf32>
    %36 = vector.broadcast %35 : vector<1x128xf32> to vector<8x128xf32>
    %37 = arith.addf %34, %36 : vector<8x128xf32>
    %cst_20 = arith.constant 0.000000e+00 : f32
    %38 = vector.broadcast %cst_20 : f32 to vector<8x128xf32>
    %39 = arith.subf %38, %37 : vector<8x128xf32>
    %40 = math.exp %39 : vector<8x128xf32>
    %cst_21 = arith.constant 1.000000e+00 : f32
    %41 = vector.broadcast %cst_21 : f32 to vector<8x128xf32>
    %42 = arith.addf %41, %40 : vector<8x128xf32>
    %43 = tpu.reciprocal %42 {approx = true} : vector<8x128xf32> -> vector<8x128xf32>
    %44 = arith.truncf %43 : vector<8x128xf32> to vector<8x128xbf16>
    %c0_22 = arith.constant 0 : index
    %c0_23 = arith.constant 0 : index
    %45 = vector.load %arg7[%c0_22, %c0_23] : memref<128x128xbf16, #tpu.memory_space<vmem>>, vector<128x128xbf16>
    %cst_24 = arith.constant dense<0.000000e+00> : vector<8x128xf32>
    %46 = tpu.matmul %44, %45, %cst_24 {dimension_numbers = #tpu.dot_dimension_numbers<[1], [0], [0], [1], [0, 0, 1, 1], [], []>} : vector<8x128xbf16>, vector<128x128xbf16>, vector<8x128xf32> -> vector<8x128xf32>
    %c0_25 = arith.constant 0 : index
    %c0_26 = arith.constant 0 : index
    %47 = vector.load %arg8[%c0_25, %c0_26] : memref<1x128xf32, #tpu.memory_space<vmem>>, vector<1x128xf32>
    %48 = vector.broadcast %47 : vector<1x128xf32> to vector<8x128xf32>
    %49 = arith.addf %46, %48 : vector<8x128xf32>
    %cst_27 = arith.constant 0.000000e+00 : f32
    %50 = vector.broadcast %cst_27 : f32 to vector<8x128xf32>
    %51 = arith.subf %50, %49 : vector<8x128xf32>
    %52 = math.exp %51 : vector<8x128xf32>
    %cst_28 = arith.constant 1.000000e+00 : f32
    %53 = vector.broadcast %cst_28 : f32 to vector<8x128xf32>
    %54 = arith.addf %53, %52 : vector<8x128xf32>
    %55 = tpu.reciprocal %54 {approx = true} : vector<8x128xf32> -> vector<8x128xf32>
    %56 = arith.truncf %55 : vector<8x128xf32> to vector<8x128xbf16>
    %c0_29 = arith.constant 0 : index
    %c0_30 = arith.constant 0 : index
    %57 = vector.load %arg9[%c0_29, %c0_30] : memref<128x128xbf16, #tpu.memory_space<vmem>>, vector<128x128xbf16>
    %cst_31 = arith.constant dense<0.000000e+00> : vector<8x128xf32>
    %58 = tpu.matmul %56, %57, %cst_31 {dimension_numbers = #tpu.dot_dimension_numbers<[1], [0], [0], [1], [0, 0, 1, 1], [], []>} : vector<8x128xbf16>, vector<128x128xbf16>, vector<8x128xf32> -> vector<8x128xf32>
    %c0_32 = arith.constant 0 : index
    %c0_33 = arith.constant 0 : index
    %59 = vector.load %arg10[%c0_32, %c0_33] : memref<1x128xf32, #tpu.memory_space<vmem>>, vector<1x128xf32>
    %60 = vector.broadcast %59 : vector<1x128xf32> to vector<8x128xf32>
    %61 = arith.addf %58, %60 : vector<8x128xf32>
    %cst_34 = arith.constant 0.000000e+00 : f32
    %62 = vector.broadcast %cst_34 : f32 to vector<8x128xf32>
    %63 = arith.subf %62, %61 : vector<8x128xf32>
    %64 = math.exp %63 : vector<8x128xf32>
    %cst_35 = arith.constant 1.000000e+00 : f32
    %65 = vector.broadcast %cst_35 : f32 to vector<8x128xf32>
    %66 = arith.addf %65, %64 : vector<8x128xf32>
    %67 = tpu.reciprocal %66 {approx = true} : vector<8x128xf32> -> vector<8x128xf32>
    %c0_36 = arith.constant 0 : index
    %c0_37 = arith.constant 0 : index
    %68 = vector.load %arg11[%c0_36, %c0_37] : memref<8x128xf32, #tpu.memory_space<vmem>>, vector<8x128xf32>
    tpu.vector_store %arg11[%c0_36, %c0_37], %67 {strides = array<i32>} : memref<8x128xf32, #tpu.memory_space<vmem>>, vector<8x128xf32>,
    return
  }
}

</mosaic_0001>

<llo_original>
// kernel: generator_forward.1
$region0: #{generator_forward.1}
  #allocation0 [shape = 'u32[]', space=smem, size = 0x4, offset = 0x4, fixed_abs, tag = 'smem constant byte address 0x4 - core index']
  #allocation1 [shape = 'u32[72,128]{1,0:T(1,128)}', space=vmem, size = 0x9000, scoped, tag = 'internal scratch']
  %s0 = inlined_call_operand.vmem [shape: f32[8,10], index: 0, kind: input, shape index: {}]
  %s1 = inlined_call_operand.hbm [shape: f32[8,6], index: 1, kind: input, shape index: {}]
  %s2 = inlined_call_operand.hbm [shape: bf16[10,128], index: 2, kind: input, shape index: {}]
  %s3 = inlined_call_operand.hbm [shape: bf16[6,128], index: 3, kind: input, shape index: {}]
  %s4 = inlined_call_operand.hbm [shape: f32[1,128], index: 4, kind: input, shape index: {}]
  %s5 = inlined_call_operand.hbm [shape: f32[1,128], index: 5, kind: input, shape index: {}]
  %s6 = inlined_call_operand.hbm [shape: f32[1,128], index: 6, kind: input, shape index: {}]
  %s7 = inlined_call_operand.hbm [shape: bf16[128,128], index: 7, kind: input, shape index: {}]
  %s8 = inlined_call_operand.hbm [shape: f32[1,128], index: 8, kind: input, shape index: {}]
  %s9 = inlined_call_operand.hbm [shape: bf16[128,128], index: 9, kind: input, shape index: {}]
  %s10 = inlined_call_operand.hbm [shape: f32[1,128], index: 10, kind: input, shape index: {}]
  %s11 = inlined_call_operand.hbm [shape: f32[8,128], index: 11, kind: output, shape index: {}]
  %s12 = sld [smem:[#allocation0]]
  $region94: #{generator_forward.1} parent=0
    _
  %s14 = ssub.s32 1, %s12
  %s15 = scalar_select 0, %s14, %s12
  $region1: #{generator_forward.1} parent=0
    #allocation2 [shape = 'u8[4096]{0}', space=vmem, size = 0x1000, scoped, tag = 'input window, operand 1, single buffered']
    #allocation3 [shape = 's32[1]{0}', space=sflag, size = 0x4, scoped, tag = 'scoped memory for generator_forward.1']
    #allocation4 [shape = 's32[1]{0}', space=sflag, size = 0x4, scoped, tag = 'scoped memory for generator_forward.1']
    #allocation5 [shape = 'u8[4096]{0}', space=vmem, size = 0x1000, scoped, tag = 'input window, operand 2, single buffered']
    #allocation6 [shape = 's32[1]{0}', space=sflag, size = 0x4, scoped, tag = 'scoped memory for generator_forward.1']
    #allocation7 [shape = 'u8[2048]{0}', space=vmem, size = 0x800, scoped, tag = 'input window, operand 3, single buffered']
    #allocation8 [shape = 'u8[512]{0}', space=vmem, size = 0x400, scoped, tag = 'input window, operand 4, single buffered']
    #allocation9 [shape = 's32[1]{0}', space=sflag, size = 0x4, scoped, tag = 'scoped memory for generator_forward.1']
    #allocation10 [shape = 'u8[512]{0}', space=vmem, size = 0x400, scoped, tag = 'input window, operand 5, single buffered']
    #allocation11 [shape = 'u8[512]{0}', space=vmem, size = 0x400, scoped, tag = 'input window, operand 6, single buffered']
    #allocation12 [shape = 's32[1]{0}', space=sflag, size = 0x4, scoped, tag = 'scoped memory for generator_forward.1']
    #allocation13 [shape = 'u8[32768]{0}', space=vmem, size = 0x8000, scoped, tag = 'input window, operand 7, single buffered']
    #allocation14 [shape = 'u8[512]{0}', space=vmem, size = 0x400, scoped, tag = 'input window, operand 8, single buffered']
    #allocation15 [shape = 's32[1]{0}', space=sflag, size = 0x4, scoped, tag = 'scoped memory for generator_forward.1']
    #allocation16 [shape = 'u8[32768]{0}', space=vmem, size = 0x8000, scoped, tag = 'input window, operand 9, single buffered']
    #allocation17 [shape = 'u8[512]{0}', space=vmem, size = 0x400, scoped, tag = 'input window, operand 10, single buffered']
    #allocation18 [shape = 's32[1]{0}', space=sflag, size = 0x4, scoped, tag = 'scoped memory for generator_forward.1']
    #allocation19 [shape = 'u8[4096]{0}', space=vmem, size = 0x1000, scoped, tag = 'output window, operand 0, single buffered']
    %16 = vsyncpa [#allocation3], 0
    %17 = vsyncpa [#allocation6], 0
    %18 = vsyncpa [#allocation9], 0
    %19 = vsyncpa [#allocation12], 0
    %20 = vsyncpa [#allocation15], 0
    %21 = vsyncpa [#allocation18], 0
    %22 = vsyncpa [#allocation4], 0
    // Predicated region
    $region2: #{generator_forward.1} parent=1 // pred_check
      _
    $region3: #{generator_forward.1} parent=1 // pred_check_branch
      %24 = sbr.rel (0) target = $region5
    $region4: #{generator_forward.1} parent=1 // pred_region
      _
    $region5: #{generator_forward.1} parent=1 // pred_fallthru
      _
    // Predicated region
    $region6: #{generator_forward.1} parent=1 // pred_check
      _
    $region7: #{generator_forward.1} parent=1 // pred_check_branch
      %26 = sbr.rel (0) target = $region9
    $region8: #{generator_forward.1} parent=1 // pred_region
      %28 = vsyncadd [#allocation3], 0
      %s30 = sshll.u32 %s1, 4
      %s31 = int_to_ptr.hbm [resolvable:$true] %s30
      %s32 = sshll.u32 [#allocation2], 4
      %s33 = int_to_ptr.vmem [resolvable:$true] %s32
      %35 = dma.hbm_to_vmem [thread:$0]  %s31, 128, %s33, [#allocation3]
    $region9: #{generator_forward.1} parent=1 // pred_fallthru
      _
    // Predicated region
    $region10: #{generator_forward.1} parent=1 // pred_check
      _
    $region11: #{generator_forward.1} parent=1 // pred_check_branch
      %37 = sbr.rel (0) target = $region13
    $region12: #{generator_forward.1} parent=1 // pred_region
      %39 = vsyncadd [#allocation6], 0
      %s40 = sshll.u32 %s2, 4
      %s41 = int_to_ptr.hbm [resolvable:$true] %s40
      %s42 = sshll.u32 [#allocation5], 4
      %s43 = int_to_ptr.vmem [resolvable:$true] %s42
      %48 = dma.hbm_to_vmem [thread:$0]  %s41, 128, %s43, [#allocation6], 64, 64, 4
    $region13: #{generator_forward.1} parent=1 // pred_fallthru
      _
    // Predicated region
    $region14: #{generator_forward.1} parent=1 // pred_check
      _
    $region15: #{generator_forward.1} parent=1 // pred_check_branch
      %50 = sbr.rel (0) target = $region17
    $region16: #{generator_forward.1} parent=1 // pred_region
      %52 = vsyncadd [#allocation6], 0
      %s54 = sshll.u32 %s3, 4
      %s55 = int_to_ptr.hbm [resolvable:$true] %s54
      %s56 = sshll.u32 [#allocation7], 4
      %s57 = int_to_ptr.vmem [resolvable:$true] %s56
      %59 = dma.hbm_to_vmem [thread:$0]  %s55, 64, %s57, [#allocation6]
    $region17: #{generator_forward.1} parent=1 // pred_fallthru
      _
    // Predicated region
    $region18: #{generator_forward.1} parent=1 // pred_check
      _
    $region19: #{generator_forward.1} parent=1 // pred_check_branch
      %61 = sbr.rel (0) target = $region21
    $region20: #{generator_forward.1} parent=1 // pred_region
      %63 = vsyncadd [#allocation9], 0
      %s65 = sshll.u32 %s4, 4
      %s66 = int_to_ptr.hbm [resolvable:$true] %s65
      %s67 = sshll.u32 [#allocation8], 4
      %s68 = int_to_ptr.vmem [resolvable:$true] %s67
      %70 = dma.hbm_to_vmem [thread:$0]  %s66, 16, %s68, [#allocation9]
    $region21: #{generator_forward.1} parent=1 // pred_fallthru
      _
    // Predicated region
    $region22: #{generator_forward.1} parent=1 // pred_check
      _
    $region23: #{generator_forward.1} parent=1 // pred_check_branch
      %72 = sbr.rel (0) target = $region25
    $region24: #{generator_forward.1} parent=1 // pred_region
      %74 = vsyncadd [#allocation9], 0
      %s76 = sshll.u32 %s5, 4
      %s77 = int_to_ptr.hbm [resolvable:$true] %s76
      %s78 = sshll.u32 [#allocation10], 4
      %s79 = int_to_ptr.vmem [resolvable:$true] %s78
      %81 = dma.hbm_to_vmem [thread:$0]  %s77, 16, %s79, [#allocation9]
    $region25: #{generator_forward.1} parent=1 // pred_fallthru
      _
    // Predicated region
    $region26: #{generator_forward.1} parent=1 // pred_check
      _
    $region27: #{generator_forward.1} parent=1 // pred_check_branch
      %83 = sbr.rel (0) target = $region29
    $region28: #{generator_forward.1} parent=1 // pred_region
      %85 = vsyncadd [#allocation12], 0
      %s87 = sshll.u32 %s6, 4
      %s88 = int_to_ptr.hbm [resolvable:$true] %s87
      %s89 = sshll.u32 [#allocation11], 4
      %s90 = int_to_ptr.vmem [resolvable:$true] %s89
      %92 = dma.hbm_to_vmem [thread:$0]  %s88, 16, %s90, [#allocation12]
    $region29: #{generator_forward.1} parent=1 // pred_fallthru
      _
    // Predicated region
    $region30: #{generator_forward.1} parent=1 // pred_check
      _
    $region31: #{generator_forward.1} parent=1 // pred_check_branch
      %94 = sbr.rel (0) target = $region33
    $region32: #{generator_forward.1} parent=1 // pred_region
      %96 = vsyncadd [#allocation12], 0
      %s97 = sshll.u32 %s7, 4
      %s98 = int_to_ptr.hbm [resolvable:$true] %s97
      %s99 = sshll.u32 [#allocation13], 4
      %s100 = int_to_ptr.vmem [resolvable:$true] %s99
      %105 = dma.hbm_to_vmem [thread:$0]  %s98, 1024, %s100, [#allocation12], 64, 64, 4
    $region33: #{generator_forward.1} parent=1 // pred_fallthru
      _
    // Predicated region
    $region34: #{generator_forward.1} parent=1 // pred_check
      _
    $region35: #{generator_forward.1} parent=1 // pred_check_branch
      %107 = sbr.rel (0) target = $region37
    $region36: #{generator_forward.1} parent=1 // pred_region
      %109 = vsyncadd [#allocation15], 0
      %s111 = sshll.u32 %s8, 4
      %s112 = int_to_ptr.hbm [resolvable:$true] %s111
      %s113 = sshll.u32 [#allocation14], 4
      %s114 = int_to_ptr.vmem [resolvable:$true] %s113
      %116 = dma.hbm_to_vmem [thread:$0]  %s112, 16, %s114, [#allocation15]
    $region37: #{generator_forward.1} parent=1 // pred_fallthru
      _
    // Predicated region
    $region38: #{generator_forward.1} parent=1 // pred_check
      _
    $region39: #{generator_forward.1} parent=1 // pred_check_branch
      %118 = sbr.rel (0) target = $region41
    $region40: #{generator_forward.1} parent=1 // pred_region
      %120 = vsyncadd [#allocation15], 0
      %s121 = sshll.u32 %s9, 4
      %s122 = int_to_ptr.hbm [resolvable:$true] %s121
      %s123 = sshll.u32 [#allocation16], 4
      %s124 = int_to_ptr.vmem [resolvable:$true] %s123
      %129 = dma.hbm_to_vmem [thread:$0]  %s122, 1024, %s124, [#allocation15], 64, 64, 4
    $region41: #{generator_forward.1} parent=1 // pred_fallthru
      _
    // Predicated region
    $region42: #{generator_forward.1} parent=1 // pred_check
      _
    $region43: #{generator_forward.1} parent=1 // pred_check_branch
      %131 = sbr.rel (0) target = $region45
    $region44: #{generator_forward.1} parent=1 // pred_region
      %133 = vsyncadd [#allocation18], 0
      %s135 = sshll.u32 %s10, 4
      %s136 = int_to_ptr.hbm [resolvable:$true] %s135
      %s137 = sshll.u32 [#allocation17], 4
      %s138 = int_to_ptr.vmem [resolvable:$true] %s137
      %140 = dma.hbm_to_vmem [thread:$0]  %s136, 16, %s138, [#allocation18]
    $region45: #{generator_forward.1} parent=1 // pred_fallthru
      _
    // Predicated region
    $region46: #{generator_forward.1} parent=1 // pred_check
      _
    $region47: #{generator_forward.1} parent=1 // pred_check_branch
      %142 = sbr.rel (0) target = $region49
    $region48: #{generator_forward.1} parent=1 // pred_region
      %144 = dma.done [#allocation3], 128
    $region49: #{generator_forward.1} parent=1 // pred_fallthru
      _
    // Predicated region
    $region50: #{generator_forward.1} parent=1 // pred_check
      _
    $region51: #{generator_forward.1} parent=1 // pred_check_branch
      %146 = sbr.rel (0) target = $region53
    $region52: #{generator_forward.1} parent=1 // pred_region
      %148 = dma.done [#allocation6], 128
    $region53: #{generator_forward.1} parent=1 // pred_fallthru
      _
    // Predicated region
    $region54: #{generator_forward.1} parent=1 // pred_check
      _
    $region55: #{generator_forward.1} parent=1 // pred_check_branch
      %150 = sbr.rel (0) target = $region57
    $region56: #{generator_forward.1} parent=1 // pred_region
      %152 = dma.done [#allocation6], 64
    $region57: #{generator_forward.1} parent=1 // pred_fallthru
      _
    // Predicated region
    $region58: #{generator_forward.1} parent=1 // pred_check
      _
    $region59: #{generator_forward.1} parent=1 // pred_check_branch
      %154 = sbr.rel (0) target = $region61
    $region60: #{generator_forward.1} parent=1 // pred_region
      %156 = dma.done [#allocation9], 16
    $region61: #{generator_forward.1} parent=1 // pred_fallthru
      _
    // Predicated region
    $region62: #{generator_forward.1} parent=1 // pred_check
      _
    $region63: #{generator_forward.1} parent=1 // pred_check_branch
      %158 = sbr.rel (0) target = $region65
    $region64: #{generator_forward.1} parent=1 // pred_region
      %160 = dma.done [#allocation9], 16
    $region65: #{generator_forward.1} parent=1 // pred_fallthru
      _
    // Predicated region
    $region66: #{generator_forward.1} parent=1 // pred_check
      _
    $region67: #{generator_forward.1} parent=1 // pred_check_branch
      %162 = sbr.rel (0) target = $region69
    $region68: #{generator_forward.1} parent=1 // pred_region
      %164 = dma.done [#allocation12], 16
    $region69: #{generator_forward.1} parent=1 // pred_fallthru
      _
    // Predicated region
    $region70: #{generator_forward.1} parent=1 // pred_check
      _
    $region71: #{generator_forward.1} parent=1 // pred_check_branch
      %166 = sbr.rel (0) target = $region73
    $region72: #{generator_forward.1} parent=1 // pred_region
      %168 = dma.done [#allocation12], 1024
    $region73: #{generator_forward.1} parent=1 // pred_fallthru
      _
    // Predicated region
    $region74: #{generator_forward.1} parent=1 // pred_check
      _
    $region75: #{generator_forward.1} parent=1 // pred_check_branch
      %170 = sbr.rel (0) target = $region77
    $region76: #{generator_forward.1} parent=1 // pred_region
      %172 = dma.done [#allocation15], 16
    $region77: #{generator_forward.1} parent=1 // pred_fallthru
      _
    // Predicated region
    $region78: #{generator_forward.1} parent=1 // pred_check
      _
    $region79: #{generator_forward.1} parent=1 // pred_check_branch
      %174 = sbr.rel (0) target = $region81
    $region80: #{generator_forward.1} parent=1 // pred_region
      %176 = dma.done [#allocation15], 1024
    $region81: #{generator_forward.1} parent=1 // pred_fallthru
      _
    // Predicated region
    $region82: #{generator_forward.1} parent=1 // pred_check
      _
    $region83: #{generator_forward.1} parent=1 // pred_check_branch
      %178 = sbr.rel (0) target = $region85
    $region84: #{generator_forward.1} parent=1 // pred_region
      %180 = dma.done [#allocation18], 16
    $region85: #{generator_forward.1} parent=1 // pred_fallthru
      _
    %v182 = vld [vmem:[%s0] sm:$0xff]
    %v183 = vpack.c.bf16 %v182, %v182
    %v184 = vld [vmem:[#allocation2] sm:$0xff]
    %v185 = vpack.c.bf16 %v184, %v184
    %v186 = vld [vmem:[#allocation5] sm:$0xf]
    %v187 = vld [vmem:[#allocation5 + $0x4] sm:$0x1]
    %v188 = vld [vmem:[#allocation7] sm:$0x7]
    %vm189 = vcmask 48128
    %v191 = vsel %vm189, %v185, 0
    %vm193 = vcmask 1042432
    %v195 = vsel %vm193, %v188, 0
    %197 = vmatpush.bf16.msra.mxu0 0
    %198 = vmatpush.bf16.msra.mxu0 0
    %199 = vmatpush.bf16.msra.mxu0 0
    %200 = vmatpush.bf16.msra.mxu0 0
    %201 = vmatpush.bf16.msra.mxu0 0
    %202 = vmatpush.bf16.msra.mxu0 0
    %203 = vmatpush.bf16.msra.mxu0 0
    %204 = vmatpush.bf16.msra.mxu0 %v195
    %205 = vmatmul.bf16.gmra.mxu0 %v191
    %v206 = vpop.f32.mrf.mxu0
    %v207 = vadd.f32 0.0, %v206
    %v208 = vpop.f32.mrf.mxu0
    %209 = vdwg.mxu0
    %v212 = vunpack.c.l.b16 %v186
    %v213 = vunpack.c.l.b16 %v187
    %v214 = vpack.c.b16 %v213, %v212
    %vm215 = vcmask 80896
    %v217 = vsel %vm215, %v183, 0
    %vm219 = vcmask 1044480
    %v221 = vsel %vm219, %v214, 0
    %223 = vmatpush.bf16.msra.mxu0 0
    %224 = vmatpush.bf16.msra.mxu0 0
    %225 = vmatpush.bf16.msra.mxu0 0
    %226 = vmatpush.bf16.msra.mxu0 0
    %227 = vmatpush.bf16.msra.mxu0 0
    %228 = vmatpush.bf16.msra.mxu0 0
    %229 = vmatpush.bf16.msra.mxu0 0
    %230 = vmatpush.bf16.msra.mxu0 %v221
    %231 = vmatmul.bf16.gmra.mxu0 %v217
    %v232 = vpop.f32.mrf.mxu0
    %v233 = vadd.f32 %v207, %v232
    %v234 = vpop.f32.mrf.mxu0
    %235 = vdwg.mxu0
    %v236 = vld [vmem:[#allocation8] sm:$0x1]
    %v238 = vperm.slane %v236, 0
    %v240 = vadd.f32 %v233, %v238
    %v241 = vrot.slane %v240, 4
    %v242 = vadd.f32 %v240, %v241
    %v243 = vrot.slane %v242, 2
    %v244 = vadd.f32 %v242, %v243
    %v245 = vrot.slane %v244, 1
    %v246 = vadd.f32 %v244, %v245
    %v247 = vrcp.pop 8.0
    %v248 = vmul.f32 8.0, %v247
    %v249 = vsub.f32 1.0, %v248
    %v250 = vmul.f32 %v247, %v249
    %v251 = vadd.f32 %v247, %v250
    %vm252 = vweird.f32 %v247
    %v253 = vsel %vm252, %v247, %v251
    %v254 = vmul.f32 %v246, %v253
    %v255 = vmul.f32 %v240, %v240
    %v256 = vrot.slane %v255, 4
    %v257 = vadd.f32 %v255, %v256
    %v258 = vrot.slane %v257, 2
    %v259 = vadd.f32 %v257, %v258
    %v260 = vrot.slane %v259, 1
    %v261 = vadd.f32 %v259, %v260
    %v262 = vmul.f32 %v261, %v253
    %v263 = vmul.f32 %v254, %v254
    %v264 = vsub.f32 %v262, %v263
    %v265 = vmax.f32 %v264, 0.0
    %v266 = vld [vmem:[#allocation10] sm:$0x1]
    %v267 = vsub.f32 %v240, %v254
    %v268 = vadd.f32 %v265, 1e-05
    %v269 = vrsqrt.pop %v268
    %v270 = vmul.f32 %v269, %v268
    %v271 = vmul.f32 %v270, %v269
    %v272 = vmul.f32 0.5, %v271
    %v273 = vsub.f32 1.5, %v272
    %v274 = vmul.f32 %v269, %v273
    %vm275 = vweird.f32 %v268
    %vm276 = vweird.f32 %v269
    %vm277 = vmor %vm275, %vm276
    %v278 = vsel %vm277, %v269, %v274
    %v279 = vmul.f32 %v267, %v278
    %v281 = vperm.slane %v266, 0
    %v283 = vmul.f32 %v281, %v279
    %v284 = vld [vmem:[#allocation11] sm:$0x1]
    %v286 = vperm.slane %v284, 0
    %v288 = vadd.f32 %v283, %v286
    %v289 = vsub.f32 0.0, %v288
    %v290 = vmul.f32 %v289, 1.442695
    %v291 = vpow.pop %v290
    %v292 = vadd.f32 %v291, 1.0
    %v293 = vrcp.pop %v292
    %v294 = vpack.c.bf16 %v293, %v293
    %v295 = vld [vmem:[#allocation13] sm:$0xf]
    %v296 = vld [vmem:[#allocation13 + $0x4] sm:$0xf]
    %v297 = vld [vmem:[#allocation13 + $0x8] sm:$0xf]
    %v298 = vld [vmem:[#allocation13 + $0xc] sm:$0xf]
    %v299 = vld [vmem:[#allocation13 + $0x10] sm:$0xf]
    %v300 = vld [vmem:[#allocation13 + $0x14] sm:$0xf]
    %v301 = vld [vmem:[#allocation13 + $0x18] sm:$0xf]
    %v302 = vld [vmem:[#allocation13 + $0x1c] sm:$0xf]
    %v303 = vld [vmem:[#allocation13 + $0x20] sm:$0xf]
    %v304 = vld [vmem:[#allocation13 + $0x24] sm:$0xf]
    %v305 = vld [vmem:[#allocation13 + $0x28] sm:$0xf]
    %v306 = vld [vmem:[#allocation13 + $0x2c] sm:$0xf]
    %v307 = vld [vmem:[#allocation13 + $0x30] sm:$0xf]
    %v308 = vld [vmem:[#allocation13 + $0x34] sm:$0xf]
    %v309 = vld [vmem:[#allocation13 + $0x38] sm:$0xf]
    %v310 = vld [vmem:[#allocation13 + $0x3c] sm:$0xf]
    %v311 = vld [vmem:[#allocation14] sm:$0x1]
    %v313 = vperm.slane %v311, 0
    %v331 = vunpack.c.l.b16 %v295
    %v332 = vunpack.c.l.b16 %v296
    %v333 = vunpack.c.l.b16 %v297
    %v334 = vunpack.c.l.b16 %v298
    %v335 = vunpack.c.l.b16 %v299
    %v336 = vunpack.c.l.b16 %v300
    %v337 = vunpack.c.l.b16 %v301
    %v338 = vunpack.c.l.b16 %v302
    %v339 = vunpack.c.l.b16 %v303
    %v340 = vunpack.c.l.b16 %v304
    %v341 = vunpack.c.l.b16 %v305
    %v342 = vunpack.c.l.b16 %v306
    %v343 = vunpack.c.l.b16 %v307
    %v344 = vunpack.c.l.b16 %v308
    %v345 = vunpack.c.l.b16 %v309
    %v346 = vunpack.c.l.b16 %v310
    %v347 = vpack.c.b16 %v332, %v331
    %v348 = vpack.c.b16 %v334, %v333
    %v349 = vpack.c.b16 %v336, %v335
    %v350 = vpack.c.b16 %v338, %v337
    %v351 = vpack.c.b16 %v340, %v339
    %v352 = vpack.c.b16 %v342, %v341
    %v353 = vpack.c.b16 %v344, %v343
    %v354 = vpack.c.b16 %v346, %v345
    %363 = vmatpush.bf16.msra.mxu0 %v354
    %364 = vmatpush.bf16.msra.mxu0 %v353
    %365 = vmatpush.bf16.msra.mxu0 %v352
    %366 = vmatpush.bf16.msra.mxu0 %v351
    %367 = vmatpush.bf16.msra.mxu0 %v350
    %368 = vmatpush.bf16.msra.mxu0 %v349
    %369 = vmatpush.bf16.msra.mxu0 %v348
    %370 = vmatpush.bf16.msra.mxu0 %v347
    %371 = vmatmul.bf16.gmra.mxu0 %v294
    %v372 = vpop.f32.mrf.mxu0
    %v373 = vadd.f32 %v313, %v372
    %v374 = vpop.f32.mrf.mxu0
    %375 = vdwg.mxu0
    %v376 = vsub.f32 0.0, %v373
    %v377 = vmul.f32 %v376, 1.442695
    %v378 = vpow.pop %v377
    %v379 = vadd.f32 %v378, 1.0
    %v380 = vrcp.pop %v379
    %v381 = vpack.c.bf16 %v380, %v380
    %v382 = vld [vmem:[#allocation16] sm:$0xf]
    %v383 = vld [vmem:[#allocation16 + $0x4] sm:$0xf]
    %v384 = vld [vmem:[#allocation16 + $0x8] sm:$0xf]
    %v385 = vld [vmem:[#allocation16 + $0xc] sm:$0xf]
    %v386 = vld [vmem:[#allocation16 + $0x10] sm:$0xf]
    %v387 = vld [vmem:[#allocation16 + $0x14] sm:$0xf]
    %v388 = vld [vmem:[#allocation16 + $0x18] sm:$0xf]
    %v389 = vld [vmem:[#allocation16 + $0x1c] sm:$0xf]
    %v390 = vld [vmem:[#allocation16 + $0x20] sm:$0xf]
    %v391 = vld [vmem:[#allocation16 + $0x24] sm:$0xf]
    %v392 = vld [vmem:[#allocation16 + $0x28] sm:$0xf]
    %v393 = vld [vmem:[#allocation16 + $0x2c] sm:$0xf]
    %v394 = vld [vmem:[#allocation16 + $0x30] sm:$0xf]
    %v395 = vld [vmem:[#allocation16 + $0x34] sm:$0xf]
    %v396 = vld [vmem:[#allocation16 + $0x38] sm:$0xf]
    %v397 = vld [vmem:[#allocation16 + $0x3c] sm:$0xf]
    %v398 = vld [vmem:[#allocation17] sm:$0x1]
    %v400 = vperm.slane %v398, 0
    %v418 = vunpack.c.l.b16 %v382
    %v419 = vunpack.c.l.b16 %v383
    %v420 = vunpack.c.l.b16 %v384
    %v421 = vunpack.c.l.b16 %v385
    %v422 = vunpack.c.l.b16 %v386
    %v423 = vunpack.c.l.b16 %v387
    %v424 = vunpack.c.l.b16 %v388
    %v425 = vunpack.c.l.b16 %v389
    %v426 = vunpack.c.l.b16 %v390
    %v427 = vunpack.c.l.b16 %v391
    %v428 = vunpack.c.l.b16 %v392
    %v429 = vunpack.c.l.b16 %v393
    %v430 = vunpack.c.l.b16 %v394
    %v431 = vunpack.c.l.b16 %v395
    %v432 = vunpack.c.l.b16 %v396
    %v433 = vunpack.c.l.b16 %v397
    %v434 = vpack.c.b16 %v419, %v418
    %v435 = vpack.c.b16 %v421, %v420
    %v436 = vpack.c.b16 %v423, %v422
    %v437 = vpack.c.b16 %v425, %v424
    %v438 = vpack.c.b16 %v427, %v426
    %v439 = vpack.c.b16 %v429, %v428
    %v440 = vpack.c.b16 %v431, %v430
    %v441 = vpack.c.b16 %v433, %v432
    %450 = vmatpush.bf16.msra.mxu0 %v441
    %451 = vmatpush.bf16.msra.mxu0 %v440
    %452 = vmatpush.bf16.msra.mxu0 %v439
    %453 = vmatpush.bf16.msra.mxu0 %v438
    %454 = vmatpush.bf16.msra.mxu0 %v437
    %455 = vmatpush.bf16.msra.mxu0 %v436
    %456 = vmatpush.bf16.msra.mxu0 %v435
    %457 = vmatpush.bf16.msra.mxu0 %v434
    %458 = vmatmul.bf16.gmra.mxu0 %v381
    %v459 = vpop.f32.mrf.mxu0
    %v460 = vadd.f32 %v400, %v459
    %v461 = vpop.f32.mrf.mxu0
    %462 = vdwg.mxu0
    %v463 = vsub.f32 0.0, %v460
    %v464 = vmul.f32 %v463, 1.442695
    %v465 = vpow.pop %v464
    %v466 = vadd.f32 %v465, 1.0
    %v467 = vrcp.pop %v466
    %468 = vst [vmem:[#allocation19] sm:$0xff] %v467
    // Predicated region
    $region86: #{generator_forward.1} parent=1 // pred_check
      _
    $region87: #{generator_forward.1} parent=1 // pred_check_branch
      %470 = sbr.rel (0) target = $region89
    $region88: #{generator_forward.1} parent=1 // pred_region
      %472 = vsyncadd [#allocation4], 0
      %s474 = sshll.u32 [#allocation19], 4
      %s475 = int_to_ptr.vmem [resolvable:$true] %s474
      %s476 = sshll.u32 %s11, 4
      %s477 = int_to_ptr.hbm [resolvable:$true] %s476
      %479 = dma.vmem_to_hbm [thread:$0]  %s475, 128, %s477, [#allocation4]
    $region89: #{generator_forward.1} parent=1 // pred_fallthru
      _
    // Predicated region
    $region90: #{generator_forward.1} parent=1 // pred_check
      _
    $region91: #{generator_forward.1} parent=1 // pred_check_branch
      %481 = sbr.rel (0) target = $region93
    $region92: #{generator_forward.1} parent=1 // pred_region
      %483 = dma.done [#allocation4], 128
    $region93: #{generator_forward.1} parent=1 // pred_fallthru
      _
    %484 = vsyncpa [#allocation3], 1
    %485 = vsyncpa [#allocation6], 1
    %486 = vsyncpa [#allocation9], 1
    %487 = vsyncpa [#allocation12], 1
    %488 = vsyncpa [#allocation15], 1
    %489 = vsyncpa [#allocation18], 1
    %490 = vsyncpa [#allocation4], 1

</llo_original>
